<compile_context>
chip_gen: v7x
topology: tpu7x:2x2x1
jax: 0.10.0
libtpu: 0.0.40
codegen_flags: <defaults>
</compile_context>

<pallas_src>
import jax
import jax.numpy as jnp
from jax import lax
from jax.experimental import pallas as pl
from jax.experimental.pallas import tpu as pltpu

EPS = 1e-5  # eps used by calc_mean_std in AdaIN-style code


def _pin_kernel(feat_ref, params_ref, out_ref):
    # feat_ref  : (TR, HW)  native dtype; rows = (n, c) instances, lanes = spatial
    # params_ref: (TR, 2)   f32; col 0 = style_std, col 1 = style_mean
    # out_ref   : (TR, HW)  native dtype
    x = feat_ref[...].astype(jnp.float32)
    hw = x.shape[-1]

    # calc_mean_std: mean + unbiased variance over spatial dims (torch default).
    mean = jnp.mean(x, axis=-1, keepdims=True)
    diff = x - mean
    # Trace-time constant multiply instead of divide; guard hw == 1 (torch
    # would produce NaN there -- we just avoid an inf and document it).
    inv_nm1 = jnp.float32(1.0 / max(hw - 1, 1))
    var = jnp.sum(diff * diff, axis=-1, keepdims=True) * inv_nm1
    inv_std = lax.rsqrt(var + jnp.float32(EPS))  # EUP rsqrt: replaces sqrt + divide

    # forward(): style_std.clamp_(min=0); norm * std + mean; relu.
    # Fold clamp(style_std) * (1/content_std) into one per-row scalar so the
    # per-element work is a single multiply-add + max.
    p = params_ref[...].astype(jnp.float32)
    sstd = jnp.maximum(p[:, 0:1], 0.0)
    smean = p[:, 1:2]
    scale = sstd * inv_std

    out = jnp.maximum(diff * scale + smean, 0.0)
    out_ref[...] = out.astype(out_ref.dtype)


def _round_up(x, m):
    return (x + m - 1) // m * m


def _choose_row_tile(nc, hw, *, target_block_bytes=2 << 20, min_grid_steps=8):
    """Pick a row tile so each feat/out block is ~MB-scale (HBM-bound kernel:
    large DMAs amortize the per-grid-step overhead), sized conservatively at
    4 B/elem (f32 in-kernel temps), while keeping >= min_grid_steps grid steps
    when possible so the v7x megacore (2 TCs) stays balanced.  Prefer a tile
    that divides nc exactly (avoids a full pad-copy of the input slab)."""
    bytes_per_row = max(hw * 4, 1)
    rows_for_bytes = max(8, (target_block_bytes // bytes_per_row) // 8 * 8)
    rows_for_grid = max(8, _round_up(pl.cdiv(nc, min_grid_steps), 8))
    cap = int(min(rows_for_bytes, rows_for_grid, _round_up(nc, 8)))

    if nc % 8 == 0:
        # Largest multiple of 8 that divides nc and is <= cap.
        t = (cap // 8) * 8
        while t >= 8:
            if nc % t == 0:
                # Only accept it if it is not dramatically smaller than cap;
                # otherwise the tiny-tile overhead outweighs one pad copy.
                if 2 * t >= cap:
                    return t
                break
            t -= 8
    return cap


def pin_forward(content_feat_nchw, style_std, style_mean, *, row_tile=None):
    """content_feat_nchw: (N, C, H, W), any float dtype (kept as I/O dtype)
       style_std, style_mean: (N, C, 1, 1) (the nn.Parameters)
       returns: (N, C, H, W) = relu(norm(content) * clamp(style_std, 0) + style_mean)"""
    N, C, H, W = content_feat_nchw.shape
    NC, HW = N * C, H * W
    out_dtype = content_feat_nchw.dtype

    # Instance reduction along the lane axis: (N*C, H*W) slab, native dtype.
    # TODO(synk): if HW is not a multiple of 128 (e.g. 7x7 maps), loads/stores
    # are lane-masked; pad HW at the producer for store-bound shapes.
    feat2d = content_feat_nchw.reshape(NC, HW)
    # Pack both per-instance parameters into one (NC, 2) slab -> one DMA/step.
    params = jnp.concatenate(
        [style_std.reshape(NC, 1), style_mean.reshape(NC, 1)], axis=1
    ).astype(jnp.float32)

    if row_tile is None:
        row_tile = _choose_row_tile(NC, HW)
    row_tile = max(8, _round_up(int(row_tile), 8))

    # Pad the instance axis only if the tile does not divide it (padded zero
    # rows produce finite zeros in-kernel; they are sliced off below).  For
    # typical shapes the chosen tile divides NC and this is a no-op.
    NC_pad = _round_up(NC, row_tile)
    if NC_pad != NC:
        feat2d = jnp.pad(feat2d, ((0, NC_pad - NC), (0, 0)))
        params = jnp.pad(params, ((0, NC_pad - NC), (0, 0)))

    grid = (NC_pad // row_tile,)

    out2d = pl.pallas_call(
        _pin_kernel,
        out_shape=jax.ShapeDtypeStruct((NC_pad, HW), out_dtype),
        grid_spec=pltpu.PrefetchScalarGridSpec(
            num_scalar_prefetch=0,
            grid=grid,
            in_specs=[
                pl.BlockSpec((row_tile, HW), lambda i: (i, 0)),
                pl.BlockSpec((row_tile, 2), lambda i: (i, 0)),
            ],
            out_specs=pl.BlockSpec((row_tile, HW), lambda i: (i, 0)),
        ),
        compiler_params=pltpu.CompilerParams(
            dimension_semantics=("parallel",),
            # ~2 MiB blocks x (double-buffered in + out + f32 temps) stays well
            # below this; 48 MiB is safe on v5e/v6e (128 MiB) and v7x (64 MiB).
            vmem_limit_bytes=48 * 1024 * 1024,
        ),
    )(feat2d, params)

    if NC_pad != NC:
        out2d = out2d[:NC]
    return out2d.reshape(N, C, H, W)


def _calc_mean_std_ref(feat, eps=EPS):
    # Plain-JAX replica of AdaIN calc_mean_std (used for param init + reference).
    N, C, H, W = feat.shape
    flat = feat.reshape(N, C, H * W)
    mean = jnp.mean(flat, axis=2).reshape(N, C, 1, 1)
    var = jnp.var(flat, axis=2, ddof=1).reshape(N, C, 1, 1)  # unbiased, like torch
    std = jnp.sqrt(var + eps)
    return mean, std


if __name__ == "__main__":
    key = jax.random.PRNGKey(0)
    N, C, H, W = 2, 4, 16, 16
    content_feat = jax.random.normal(key, (N, C, H, W), dtype=jnp.float32) * 2.0 + 0.5

    # __init__: style params deterministically initialized to content stats.
    content_mean, content_std = _calc_mean_std_ref(content_feat)
    style_mean = content_mean  # nn.Parameter init
    style_std = content_std    # nn.Parameter init

    out = pin_forward(content_feat, style_std, style_mean)
    out = jax.block_until_ready(out)

    # Pure-JAX reference of the forward pass.
    norm_ref = (content_feat - content_mean) / content_std
    ref = jnp.maximum(norm_ref * jnp.maximum(style_std, 0.0) + style_mean, 0.0)

    assert out.shape == (N, C, H, W)
    assert out.dtype == content_feat.dtype
    assert jnp.max(jnp.abs(out - ref)) < 1e-4, "mismatch vs reference"
    print("KERNEL_OK")
</pallas_src>

<mosaic_0001>
module attributes {stable_mosaic.version = 11 : i64} {
  func.func @_pin_kernel(%arg0: i32, %arg1: memref<8x256xf32, #tpu.memory_space<vmem>>, %arg2: memref<8x2xf32, #tpu.memory_space<vmem>>, %arg3: memref<8x256xf32, #tpu.memory_space<vmem>>) attributes {dimension_semantics = [#tpu.dimension_semantics<parallel>], iteration_bounds = array<i64: 1>, scalar_prefetch = 0 : i64, scratch_operands = 0 : i64, tpu.core_type = #tpu.core_type<tc>, window_params = [{transform_indices = @transform_0, window_bounds = array<i64: 8, 256>}, {transform_indices = @transform_1, window_bounds = array<i64: 8, 2>}, {transform_indices = @transform_2, window_bounds = array<i64: 8, 256>}]} {
    %c0 = arith.constant 0 : index
    %c0_0 = arith.constant 0 : index
    %0 = vector.load %arg1[%c0, %c0_0] : memref<8x256xf32, #tpu.memory_space<vmem>>, vector<8x256xf32>
    %cst = arith.constant dense<0.000000e+00> : vector<8xf32>
    %1 = vector.multi_reduction <add>, %0, %cst [1] : vector<8x256xf32> to vector<8xf32>
    %2 = vector.shape_cast %1 : vector<8xf32> to vector<8x1xf32>
    %cst_1 = arith.constant 2.560000e+02 : f32
    %3 = vector.broadcast %cst_1 : f32 to vector<8x1xf32>
    %4 = arith.divf %2, %3 : vector<8x1xf32>
    %5 = vector.broadcast %4 : vector<8x1xf32> to vector<8x256xf32>
    %6 = arith.subf %0, %5 : vector<8x256xf32>
    %7 = arith.mulf %6, %6 : vector<8x256xf32>
    %cst_2 = arith.constant dense<0.000000e+00> : vector<8xf32>
    %8 = vector.multi_reduction <add>, %7, %cst_2 [1] : vector<8x256xf32> to vector<8xf32>
    %9 = vector.shape_cast %8 : vector<8xf32> to vector<8x1xf32>
    %cst_3 = arith.constant 0.00392156886 : f32
    %10 = vector.broadcast %cst_3 : f32 to vector<8x1xf32>
    %11 = arith.mulf %9, %10 : vector<8x1xf32>
    %cst_4 = arith.constant 9.99999974E-6 : f32
    %12 = vector.broadcast %cst_4 : f32 to vector<8x1xf32>
    %13 = arith.addf %11, %12 : vector<8x1xf32>
    %14 = math.rsqrt %13 : vector<8x1xf32>
    %c0_5 = arith.constant 0 : index
    %c0_6 = arith.constant 0 : index
    %15 = vector.load %arg2[%c0_5, %c0_6] : memref<8x2xf32, #tpu.memory_space<vmem>>, vector<8x2xf32>
    %16 = vector.extract_strided_slice %15 {offsets = [0, 0], sizes = [8, 1], strides = [1, 1]} : vector<8x2xf32> to vector<8x1xf32>
    %cst_7 = arith.constant 0.000000e+00 : f32
    %17 = vector.broadcast %cst_7 : f32 to vector<8x1xf32>
    %18 = arith.maximumf %16, %17 : vector<8x1xf32>
    %19 = vector.extract_strided_slice %15 {offsets = [0, 1], sizes = [8, 1], strides = [1, 1]} : vector<8x2xf32> to vector<8x1xf32>
    %20 = arith.mulf %18, %14 : vector<8x1xf32>
    %21 = vector.broadcast %20 : vector<8x1xf32> to vector<8x256xf32>
    %22 = arith.mulf %6, %21 : vector<8x256xf32>
    %23 = vector.broadcast %19 : vector<8x1xf32> to vector<8x256xf32>
    %24 = arith.addf %22, %23 : vector<8x256xf32>
    %cst_8 = arith.constant 0.000000e+00 : f32
    %25 = vector.broadcast %cst_8 : f32 to vector<8x256xf32>
    %26 = arith.maximumf %24, %25 : vector<8x256xf32>
    %c0_9 = arith.constant 0 : index
    %c0_10 = arith.constant 0 : index
    %27 = vector.load %arg3[%c0_9, %c0_10] : memref<8x256xf32, #tpu.memory_space<vmem>>, vector<8x256xf32>
    tpu.vector_store %arg3[%c0_9, %c0_10], %26 {strides = array<i32>} : memref<8x256xf32, #tpu.memory_space<vmem>>, vector<8x256xf32>,
    return
  }
  func.func @transform_0(%arg0: i32) -> (i32, i32) {
    %c0_i32 = arith.constant 0 : i32
    %c0_i32_0 = arith.constant 0 : i32
    return %arg0, %c0_i32 : i32, i32
  }
  func.func @transform_1(%arg0: i32) -> (i32, i32) {
    %c0_i32 = arith.constant 0 : i32
    %c0_i32_0 = arith.constant 0 : i32
    return %arg0, %c0_i32 : i32, i32
  }
  func.func @transform_2(%arg0: i32) -> (i32, i32) {
    %c0_i32 = arith.constant 0 : i32
    %c0_i32_0 = arith.constant 0 : i32
    return %arg0, %c0_i32 : i32, i32
  }
}

</mosaic_0001>

<llo_original>
// kernel: tpu_custom_call.1
$region0: #{tpu_custom_call.1}
  #allocation0 [shape = 'u32[]', space=smem, size = 0x4, offset = 0x4, fixed_abs, tag = 'smem constant byte address 0x4 - core index']
  #allocation1 [shape = 'u32[144,128]{1,0:T(1,128)}', space=vmem, size = 0x12000, scoped, tag = 'internal scratch']
  %s0 = inlined_call_operand.hbm [shape: f32[8,256], index: 0, kind: input, shape index: {}]
  %s1 = inlined_call_operand.vmem [shape: f32[8,2], index: 1, kind: input, shape index: {}]
  %s2 = inlined_call_operand.hbm [shape: f32[8,256], index: 2, kind: output, shape index: {}]
  %s3 = sld [smem:[#allocation0]]
  $region22: #{tpu_custom_call.1} parent=0
    _
  %s5 = ssub.s32 1, %s3
  %s6 = scalar_select 0, %s5, %s3
  $region1: #{tpu_custom_call.1} parent=0
    #allocation2 [shape = 'u8[8192]{0}', space=vmem, size = 0x2000, scoped, tag = 'input window, operand 0, single buffered']
    #allocation3 [shape = 's32[1]{0}', space=sflag, size = 0x4, scoped, tag = 'scoped memory for tpu_custom_call.1']
    #allocation4 [shape = 's32[1]{0}', space=sflag, size = 0x4, scoped, tag = 'scoped memory for tpu_custom_call.1']
    #allocation5 [shape = 'u8[8192]{0}', space=vmem, size = 0x2000, scoped, tag = 'output window, operand 0, single buffered']
    %7 = vsyncpa [#allocation3], 0
    %8 = vsyncpa [#allocation4], 0
    // Predicated region
    $region2: #{tpu_custom_call.1} parent=1 // pred_check
      _
    $region3: #{tpu_custom_call.1} parent=1 // pred_check_branch
      %10 = sbr.rel (0) target = $region5
    $region4: #{tpu_custom_call.1} parent=1 // pred_region
      %s12 = ssub.s32 256, 256
      %13 = vsyncadd [#allocation3], %s12
      %s15 = sshll.u32 [#allocation2], 4
      %s16 = int_to_ptr.vmem [resolvable:$true] %s15
      %18 = dma.hbm_to_vmem [thread:$0]  %s0, 256, %s16, [#allocation3]
    $region5: #{tpu_custom_call.1} parent=1 // pred_fallthru
      _
    // Predicated region
    $region6: #{tpu_custom_call.1} parent=1 // pred_check
      _
    $region7: #{tpu_custom_call.1} parent=1 // pred_check_branch
      %20 = sbr.rel (0) target = $region9
    $region8: #{tpu_custom_call.1} parent=1 // pred_region
      _
    $region9: #{tpu_custom_call.1} parent=1 // pred_fallthru
      _
    // Predicated region
    $region10: #{tpu_custom_call.1} parent=1 // pred_check
      _
    $region11: #{tpu_custom_call.1} parent=1 // pred_check_branch
      %22 = sbr.rel (0) target = $region13
    $region12: #{tpu_custom_call.1} parent=1 // pred_region
      %23 = dma.done [#allocation3], 256
    $region13: #{tpu_custom_call.1} parent=1 // pred_fallthru
      _
    %v24 = vld [vmem:[#allocation2] sm:$0xff]
    %v25 = vld [vmem:[#allocation2 + $0x8] sm:$0xff]
    %v26 = vadd.f32 %v24, %v25
    %27 = vadd.xlane.f32.xlu0 %v26
    %v28 = vpop.xlane.xlu0 %27
    %v29 = vrcp.pop 256.0
    %v30 = vmul.f32 %v28, %v29
    %v31 = vsub.f32 %v24, %v30
    %v32 = vsub.f32 %v25, %v30
    %v33 = vmul.f32 %v31, %v31
    %v34 = vmul.f32 %v32, %v32
    %v35 = vadd.f32 %v33, %v34
    %36 = vadd.xlane.f32.xlu0 %v35
    %v37 = vpop.xlane.xlu0 %36
    %v38 = vmul.f32 %v37, 0.003921569
    %v39 = vadd.f32 %v38, 1e-05
    %v40 = vrsqrt.pop %v39
    %v41 = vld [vmem:[%s1] sm:$0xff]
    %v42 = vmax.f32 %v41, 0.0
    %v43 = vmul.f32 %v42, %v40
    %45 = vset.pattern.permute.xlu0 0
    %46 = vperm.xlu0 %45, %v43
    %v47 = vpop.permute.xlu0 %46
    %v49 = vmul.f32 %v31, %v47
    %v50 = vmul.f32 %v32, %v47
    %52 = vset.pattern.permute.xlu0 1
    %53 = vperm.xlu0 %52, %v41
    %v54 = vpop.permute.xlu0 %53
    %v56 = vadd.f32 %v49, %v54
    %v57 = vadd.f32 %v50, %v54
    %v58 = vmax.f32 %v56, 0.0
    %v59 = vmax.f32 %v57, 0.0
    %60 = vst [vmem:[#allocation5] sm:$0xff] %v58
    %61 = vst [vmem:[#allocation5 + $0x8] sm:$0xff] %v59
    // Predicated region
    $region14: #{tpu_custom_call.1} parent=1 // pred_check
      _
    $region15: #{tpu_custom_call.1} parent=1 // pred_check_branch
      %63 = sbr.rel (0) target = $region17
    $region16: #{tpu_custom_call.1} parent=1 // pred_region
      %s65 = ssub.s32 256, 256
      %66 = vsyncadd [#allocation4], %s65
      %s68 = sshll.u32 [#allocation5], 4
      %s69 = int_to_ptr.vmem [resolvable:$true] %s68
      %71 = dma.vmem_to_hbm [thread:$0]  %s69, 256, %s2, [#allocation4]
    $region17: #{tpu_custom_call.1} parent=1 // pred_fallthru
      _
    // Predicated region
    $region18: #{tpu_custom_call.1} parent=1 // pred_check
      _
    $region19: #{tpu_custom_call.1} parent=1 // pred_check_branch
      %73 = sbr.rel (0) target = $region21
    $region20: #{tpu_custom_call.1} parent=1 // pred_region
      %74 = dma.done [#allocation4], 256
    $region21: #{tpu_custom_call.1} parent=1 // pred_fallthru
      _
    %75 = vsyncpa [#allocation3], 1
    %76 = vsyncpa [#allocation4], 1

</llo_original>
